<compile_context>
chip_gen: v5e
topology: v5e:2x2
jax: 0.10.0
libtpu: 0.0.40
codegen_flags: <defaults>
</compile_context>

<pallas_src>
import math

import jax
import jax.numpy as jnp
from jax.experimental import pallas as pl
from jax.experimental.pallas import tpu as pltpu


def _round_up(x, m):
    return ((x + m - 1) // m) * m


def _make_power_sums_kernel(n_moments):
    """grid = (tensor t in {0,1}, row-tile i); accumulates per-column sum(x^k)."""

    def kernel(x1_ref, x2_ref, o_ref):
        t = pl.program_id(0)
        i = pl.program_id(1)

        @pl.when(i == 0)
        def _init():
            o_ref[...] = jnp.zeros_like(o_ref)

        def _accumulate(tile):
            x = tile.astype(jnp.float32)                 # (tm, d_eff)
            xk = x
            rows = [jnp.sum(xk, axis=0, keepdims=True)]  # S_1 partial
            for _ in range(2, n_moments + 1):
                xk = xk * x                              # x^k
                rows.append(jnp.sum(xk, axis=0, keepdims=True))
            o_ref[...] += jnp.concatenate(rows, axis=0)  # (n_moments, d_eff)

        # Only the tensor selected by the leading grid axis is touched; the
        # other input's block index is frozen by its index_map, so it is not
        # re-streamed from HBM.
        @pl.when(t == 0)
        def _x1():
            _accumulate(x1_ref[...])

        @pl.when(t == 1)
        def _x2():
            _accumulate(x2_ref[...])

    return kernel


def _vmem_budget_bytes():
    try:
        cap = int(pltpu.get_tpu_info().vmem_capacity_bytes)
    except Exception:
        cap = 64 * 1024 * 1024           # conservative fallback (v7x per-core VMEM)
    return (cap * 3) // 4                # leave headroom for the compiler


def _fold_plan(d):
    """Lane-dense plan: returns (fold, d_eff)."""
    if d % 128 == 0:
        return 1, d
    if d < 128 and 128 % d == 0:
        return 128 // d, 128             # fold rows into lanes (demo d=32 -> 4x)
    return 1, _round_up(d, 128)          # pad feature dim with zero columns


def _prep(x2d, fold, d_eff):
    """Reshape/pad an (M, d) slab to a lane-dense (rows, d_eff) slab."""
    if fold > 1:
        flat = x2d.reshape(-1)
        pad = (-flat.shape[0]) % d_eff
        if pad:
            flat = jnp.pad(flat, (0, pad))
        return flat.reshape(-1, d_eff)
    d = x2d.shape[1]
    if d_eff != d:
        x2d = jnp.pad(x2d, ((0, 0), (0, d_eff - d)))
    return x2d


def _power_sums(x1_2d, x2_2d, n_moments):
    """Returns (2, n_moments, d) raw power sums S_k = sum(x^k, axis=0)."""
    d = x1_2d.shape[1]
    fold, d_eff = _fold_plan(d)

    xe1 = _prep(x1_2d, fold, d_eff)
    xe2 = _prep(x2_2d, fold, d_eff)

    itemsize = max(jnp.dtype(xe1.dtype).itemsize, jnp.dtype(xe2.dtype).itemsize)
    sub = max(8, 32 // itemsize)         # sublane packing: 8 (f32), 16 (bf16), 32 (i8)

    vmem_limit = _vmem_budget_bytes()
    # Per-tile-row footprint: 2 inputs x 2 pipeline buffers (streamed dtype)
    # plus ~3 f32 temporaries (cast + running power) for the active tile.
    per_row = d_eff * (4 * itemsize + 12)
    max_tm = max(sub, (((vmem_limit // 2) // per_row) // sub) * sub)
    rows = max(xe1.shape[0], xe2.shape[0], 1)
    tm = min(1024, max_tm, _round_up(rows, sub))

    m_pad = _round_up(rows, tm)
    if xe1.shape[0] != m_pad:
        xe1 = jnp.pad(xe1, ((0, m_pad - xe1.shape[0]), (0, 0)))
    if xe2.shape[0] != m_pad:
        xe2 = jnp.pad(xe2, ((0, m_pad - xe2.shape[0]), (0, 0)))
    nt = m_pad // tm

    cost = pl.CostEstimate(
        flops=2 * 2 * n_moments * m_pad * d_eff,
        transcendentals=0,
        bytes_accessed=2 * m_pad * d_eff * itemsize + 2 * n_moments * d_eff * 4,
    )

    s = pl.pallas_call(
        _make_power_sums_kernel(n_moments),
        out_shape=jax.ShapeDtypeStruct((2, n_moments, d_eff), jnp.float32),
        grid=(2, nt),
        in_specs=[
            # x1 streams only while t == 0, x2 only while t == 1; the other
            # tensor's block index stays constant -> each tensor read once.
            pl.BlockSpec((tm, d_eff), lambda t, i: (i * (1 - t), 0)),
            pl.BlockSpec((tm, d_eff), lambda t, i: (i * t, 0)),
        ],
        out_specs=pl.BlockSpec((None, n_moments, d_eff), lambda t, i: (t, 0, 0)),
        compiler_params=pltpu.CompilerParams(
            dimension_semantics=("parallel", "arbitrary"),
            vmem_limit_bytes=int(vmem_limit),
        ),
        cost_estimate=cost,
    )(xe1, xe2)

    # Undo the lane-dense folding / feature padding in the (tiny) JAX epilogue.
    if fold > 1:
        s = s.reshape(2, n_moments, fold, d).sum(axis=2)
    elif d_eff != d:
        s = s[:, :, :d]
    return s


def _matchnorm(a, b):
    return jnp.sqrt(jnp.sum((a - b) ** 2) + 1e-12)


def _central_moments(s_t, n, n_moments):
    """[mean, E[(x-mu)^2], ..., E[(x-mu)^n]] from raw power sums (n_moments, d)."""
    n = jnp.float32(n)
    mu = s_t[0] / n
    moms = [mu]
    for k in range(2, n_moments + 1):
        ck = jnp.zeros_like(mu)
        for j in range(k + 1):
            term = math.comb(k, j) * ((-mu) ** (k - j))
            if j > 0:
                term = term * (s_t[j - 1] / n)
            ck = ck + term
        moms.append(ck)
    return moms


def cmd_forward(x1, x2, n_moments=3):
    """Pallas implementation of CMD.forward(x1, x2, n_moments)."""
    d = x1.shape[-1]
    assert x2.shape[-1] == d, "x1 and x2 must share the feature dimension"
    x1_2d = x1.reshape(-1, d)
    x2_2d = x2.reshape(-1, d)
    n1, n2 = x1_2d.shape[0], x2_2d.shape[0]
    if n1 == 0 or n2 == 0:
        raise ValueError("CMD requires at least one row per input")

    s = _power_sums(x1_2d, x2_2d, n_moments)       # (2, n_moments, d) f32
    m1 = _central_moments(s[0], n1, n_moments)
    m2 = _central_moments(s[1], n2, n_moments)

    total = _matchnorm(m1[0], m2[0])               # mean term
    for k in range(1, n_moments):                  # central moments 2..n_moments
        total = total + _matchnorm(m1[k], m2[k])
    return total


if __name__ == "__main__":
    # Small, module-consistent config: two (batch, seq, hidden) representations.
    batch, seq, hidden = 2, 8, 32

    key = jax.random.PRNGKey(0)
    k1, k2 = jax.random.split(key)
    x1 = jax.random.normal(k1, (batch, seq, hidden), dtype=jnp.float32)
    x2 = 0.5 * jax.random.normal(k2, (batch, seq, hidden), dtype=jnp.float32) + 0.1

    out = cmd_forward(x1, x2, n_moments=3)
    jax.block_until_ready(out)

    # Pure-JAX reference mirroring the PyTorch module.
    def cmd_ref(a, b, n_moments=3):
        a = a.reshape(-1, a.shape[-1])
        b = b.reshape(-1, b.shape[-1])
        ma, mb = jnp.mean(a, 0), jnp.mean(b, 0)
        sa, sb = a - ma, b - mb

        def mn(u, v):
            return jnp.sqrt(jnp.sum((u - v) ** 2) + 1e-12)

        s = mn(ma, mb)
        for k in range(2, n_moments + 1):
            s = s + mn(jnp.mean(sa ** k, 0), jnp.mean(sb ** k, 0))
        return s

    ref = cmd_ref(x1, x2, 3)
    assert out.shape == ()
    assert jnp.allclose(out, ref, atol=1e-4, rtol=1e-4), (out, ref)

    print("KERNEL_OK")
</pallas_src>

<mosaic_0001>
module attributes {stable_mosaic.version = 11 : i64} {
  func.func @kernel(%arg0: i32, %arg1: i32, %arg2: memref<8x128xf32, #tpu.memory_space<vmem>>, %arg3: memref<8x128xf32, #tpu.memory_space<vmem>>, %arg4: memref<1x3x128xf32, #tpu.memory_space<vmem>>) attributes {dimension_semantics = [#tpu.dimension_semantics<parallel>, #tpu.dimension_semantics<arbitrary>], iteration_bounds = array<i64: 2, 1>, scalar_prefetch = 0 : i64, scratch_operands = 0 : i64, tpu.core_type = #tpu.core_type<tc>, window_params = [{transform_indices = @transform_0, window_bounds = array<i64: 8, 128>}, {transform_indices = @transform_1, window_bounds = array<i64: 8, 128>}, {transform_indices = @transform_2, window_bounds = array<i64: 1, 3, 128>}]} {
    %c0_i32 = arith.constant 0 : i32
    %0 = arith.cmpi eq, %arg1, %c0_i32 : i32
    %1 = arith.extui %0 : i1 to i32
    %c0_i32_0 = arith.constant 0 : i32
    %2 = arith.cmpi ne, %1, %c0_i32_0 : i32
    scf.if %2 {
      %cst = arith.constant 0.000000e+00 : f32
      %9 = vector.broadcast %cst : f32 to vector<3x128xf32>
      %c0 = arith.constant 0 : index
      %c0_4 = arith.constant 0 : index
      %c0_5 = arith.constant 0 : index
      %10 = vector.load %arg4[%c0, %c0_4, %c0_5] : memref<1x3x128xf32, #tpu.memory_space<vmem>>, vector<1x3x128xf32>
      %11 = vector.shape_cast %10 : vector<1x3x128xf32> to vector<3x128xf32>
      %12 = vector.shape_cast %9 : vector<3x128xf32> to vector<1x3x128xf32>
      tpu.vector_store %arg4[%c0, %c0_4, %c0_5], %12 {strides = array<i32>} : memref<1x3x128xf32, #tpu.memory_space<vmem>>, vector<1x3x128xf32>,
    } else {
    }
    %c0_i32_1 = arith.constant 0 : i32
    %3 = arith.cmpi eq, %arg0, %c0_i32_1 : i32
    %4 = arith.extui %3 : i1 to i32
    %c0_i32_2 = arith.constant 0 : i32
    %5 = arith.cmpi ne, %4, %c0_i32_2 : i32
    scf.if %5 {
      %c0 = arith.constant 0 : index
      %c0_4 = arith.constant 0 : index
      %9 = vector.load %arg2[%c0, %c0_4] : memref<8x128xf32, #tpu.memory_space<vmem>>, vector<8x128xf32>
      %cst = arith.constant dense<0.000000e+00> : vector<128xf32>
      %10 = vector.multi_reduction <add>, %9, %cst [0] : vector<8x128xf32> to vector<128xf32>
      %11 = vector.shape_cast %10 : vector<128xf32> to vector<1x128xf32>
      %12 = arith.mulf %9, %9 : vector<8x128xf32>
      %cst_5 = arith.constant dense<0.000000e+00> : vector<128xf32>
      %13 = vector.multi_reduction <add>, %12, %cst_5 [0] : vector<8x128xf32> to vector<128xf32>
      %14 = vector.shape_cast %13 : vector<128xf32> to vector<1x128xf32>
      %15 = arith.mulf %12, %9 : vector<8x128xf32>
      %cst_6 = arith.constant dense<0.000000e+00> : vector<128xf32>
      %16 = vector.multi_reduction <add>, %15, %cst_6 [0] : vector<8x128xf32> to vector<128xf32>
      %17 = vector.shape_cast %16 : vector<128xf32> to vector<1x128xf32>
      %c0_7 = arith.constant 0 : index
      %c0_8 = arith.constant 0 : index
      %c0_9 = arith.constant 0 : index
      %18 = vector.load %arg4[%c0_7, %c0_8, %c0_9] : memref<1x3x128xf32, #tpu.memory_space<vmem>>, vector<1x3x128xf32>
      %19 = vector.shape_cast %18 : vector<1x3x128xf32> to vector<3x128xf32>
      %20 = tpu.concatenate %11, %14, %17 in 0 : vector<1x128xf32>, vector<1x128xf32>, vector<1x128xf32> -> vector<3x128xf32>
      %21 = arith.addf %19, %20 : vector<3x128xf32>
      %c0_10 = arith.constant 0 : index
      %c0_11 = arith.constant 0 : index
      %c0_12 = arith.constant 0 : index
      %22 = vector.load %arg4[%c0_10, %c0_11, %c0_12] : memref<1x3x128xf32, #tpu.memory_space<vmem>>, vector<1x3x128xf32>
      %23 = vector.shape_cast %22 : vector<1x3x128xf32> to vector<3x128xf32>
      %24 = vector.shape_cast %21 : vector<3x128xf32> to vector<1x3x128xf32>
      tpu.vector_store %arg4[%c0_10, %c0_11, %c0_12], %24 {strides = array<i32>} : memref<1x3x128xf32, #tpu.memory_space<vmem>>, vector<1x3x128xf32>,
    } else {
    }
    %c1_i32 = arith.constant 1 : i32
    %6 = arith.cmpi eq, %arg0, %c1_i32 : i32
    %7 = arith.extui %6 : i1 to i32
    %c0_i32_3 = arith.constant 0 : i32
    %8 = arith.cmpi ne, %7, %c0_i32_3 : i32
    scf.if %8 {
      %c0 = arith.constant 0 : index
      %c0_4 = arith.constant 0 : index
      %9 = vector.load %arg3[%c0, %c0_4] : memref<8x128xf32, #tpu.memory_space<vmem>>, vector<8x128xf32>
      %cst = arith.constant dense<0.000000e+00> : vector<128xf32>
      %10 = vector.multi_reduction <add>, %9, %cst [0] : vector<8x128xf32> to vector<128xf32>
      %11 = vector.shape_cast %10 : vector<128xf32> to vector<1x128xf32>
      %12 = arith.mulf %9, %9 : vector<8x128xf32>
      %cst_5 = arith.constant dense<0.000000e+00> : vector<128xf32>
      %13 = vector.multi_reduction <add>, %12, %cst_5 [0] : vector<8x128xf32> to vector<128xf32>
      %14 = vector.shape_cast %13 : vector<128xf32> to vector<1x128xf32>
      %15 = arith.mulf %12, %9 : vector<8x128xf32>
      %cst_6 = arith.constant dense<0.000000e+00> : vector<128xf32>
      %16 = vector.multi_reduction <add>, %15, %cst_6 [0] : vector<8x128xf32> to vector<128xf32>
      %17 = vector.shape_cast %16 : vector<128xf32> to vector<1x128xf32>
      %c0_7 = arith.constant 0 : index
      %c0_8 = arith.constant 0 : index
      %c0_9 = arith.constant 0 : index
      %18 = vector.load %arg4[%c0_7, %c0_8, %c0_9] : memref<1x3x128xf32, #tpu.memory_space<vmem>>, vector<1x3x128xf32>
      %19 = vector.shape_cast %18 : vector<1x3x128xf32> to vector<3x128xf32>
      %20 = tpu.concatenate %11, %14, %17 in 0 : vector<1x128xf32>, vector<1x128xf32>, vector<1x128xf32> -> vector<3x128xf32>
      %21 = arith.addf %19, %20 : vector<3x128xf32>
      %c0_10 = arith.constant 0 : index
      %c0_11 = arith.constant 0 : index
      %c0_12 = arith.constant 0 : index
      %22 = vector.load %arg4[%c0_10, %c0_11, %c0_12] : memref<1x3x128xf32, #tpu.memory_space<vmem>>, vector<1x3x128xf32>
      %23 = vector.shape_cast %22 : vector<1x3x128xf32> to vector<3x128xf32>
      %24 = vector.shape_cast %21 : vector<3x128xf32> to vector<1x3x128xf32>
      tpu.vector_store %arg4[%c0_10, %c0_11, %c0_12], %24 {strides = array<i32>} : memref<1x3x128xf32, #tpu.memory_space<vmem>>, vector<1x3x128xf32>,
    } else {
    }
    return
  }
  func.func @transform_0(%arg0: i32, %arg1: i32) -> (i32, i32) {
    %c1_i32 = arith.constant 1 : i32
    %0 = arith.subi %c1_i32, %arg0 : i32
    %1 = arith.muli %arg1, %0 : i32
    %c0_i32 = arith.constant 0 : i32
    %c0_i32_0 = arith.constant 0 : i32
    return %1, %c0_i32 : i32, i32
  }
  func.func @transform_1(%arg0: i32, %arg1: i32) -> (i32, i32) {
    %0 = arith.muli %arg1, %arg0 : i32
    %c0_i32 = arith.constant 0 : i32
    %c0_i32_0 = arith.constant 0 : i32
    return %0, %c0_i32 : i32, i32
  }
  func.func @transform_2(%arg0: i32, %arg1: i32) -> (i32, i32, i32) {
    %c0_i32 = arith.constant 0 : i32
    %c0_i32_0 = arith.constant 0 : i32
    %c0_i32_1 = arith.constant 0 : i32
    return %arg0, %c0_i32, %c0_i32_0 : i32, i32, i32
  }
}

</mosaic_0001>

<llo_original>
// kernel: tpu_custom_call.1
$region0: #{tpu_custom_call.1}
  #allocation0 [shape = 'u32[]', space=smem, size = 0x4, offset = 0x4, fixed_abs, tag = 'smem constant byte address 0x4 - core index']
  #allocation1 [shape = 'u32[72,128]{1,0:T(1,128)}', space=vmem, size = 0x9000, scoped, tag = 'internal scratch']
  %s0 = inlined_call_operand.hbm [shape: f32[8,128], index: 0, kind: input, shape index: {}]
  %s1 = inlined_call_operand.hbm [shape: f32[8,128], index: 1, kind: input, shape index: {}]
  %s2 = inlined_call_operand.vmem [shape: f32[2,3,128], index: 2, kind: output, shape index: {}]
  %s3 = sld [smem:[#allocation0]]
  $region61: #{tpu_custom_call.1} parent=0
    _
  %s5 = ssub.s32 1, %s3
  %s6 = scalar_select 0, %s5, %s3
  $region1: #{tpu_custom_call.1} parent=0
    #allocation2 [shape = 'u8[8192]{0}', space=vmem, size = 0x2000, scoped, tag = 'input window, operand 0']
    #allocation3 [shape = 's32[2]{0}', space=sflag, size = 0x8, scoped, tag = 'scoped memory for tpu_custom_call.1']
    #allocation4 [shape = 'u8[8192]{0}', space=vmem, size = 0x2000, scoped, tag = 'input window, operand 1']
    #allocation5 [shape = 's32[2]{0}', space=sflag, size = 0x8, scoped, tag = 'scoped memory for tpu_custom_call.1']
    %7 = vsyncpa [#allocation3], 0
    %s8 = scalar_lea.sflag [#allocation3], 1
    %9 = vsyncpa %s8, 0
    %10 = vsyncpa [#allocation5], 0
    %s11 = scalar_lea.sflag [#allocation5], 1
    %12 = vsyncpa %s11, 0
    loop: start=0, step=1, limit=4
    $region2: #{tpu_custom_call.1} parent=1 // loop_pre_header
      _
    $region3: #{tpu_custom_call.1} parent=1 // loop_header
      %s14 = sphi 0, %s18
      %p15 = scmp.ge.s32.totalorder %s14, 4
      %s21 = sphi 0, %s33
      %s22 = sphi 0, %s29
      %s23 = sphi 0, %s21
      %s24 = sphi 0, %s22
      %s25 = sphi 0, %s23
      %s26 = sphi 0, %s24
      %s40 = sphi 0, %s42
      %s43 = sphi 0, %s40
      %s44 = sphi 0, %s43
      %s60 = sphi 0, %s44
      %s68 = sphi 0, %s70
      %s71 = sphi 0, %s68
      %s72 = sphi 0, %s71
      %s88 = sphi 0, %s72
      %s94 = sphi 0, %s96
      %s97 = sphi 0, %s94
      %s98 = sphi 0, %s97
      %s114 = sphi 0, %s98
    $region4: #{tpu_custom_call.1} parent=1 // loop_header_branch
      %17 = sbr.rel (%p15) target = $region8
    $region5: #{tpu_custom_call.1} parent=1 // loop_body
      %s19 = ssub.s32 %s14, 1
      %s20 = ssub.s32 %s14, 2
      %s27 = sadd.s32 1, %s22
      %p28 = scmp.ge.s32.totalorder %s27, 1
      %s29 = scalar_select %p28, 0, %s27
      %s30 = sadd.s32 1, %s21
      %s31 = scalar_select %p28, %s30, %s21
      %p32 = scmp.ge.s32.totalorder %s31, 2
      %s33 = scalar_select %p32, 0, %s31
      %s34 = ssub.s32 1, %s21
      %s35 = smul.u32 %s22, %s34
      %s36 = ssub.s32 1, %s33
      %s37 = smul.u32 %s29, %s36
      %s38 = ssub.s32 %s35, %s37
      %p39 = scmp.eq.s32.totalorder %s38, 0
      %s41 = sadd.s32 %s40, 1
      %s42 = scalar_select %p39, %s40, %s41
      %p45 = pneg %p39
      %p46 = scmp.eq.s32.totalorder %s14, 1
      %p47 = por %p45, %p46
      %p48 = scmp.ne.s32.totalorder %s40, %s43
      %p49 = scmp.eq.s32.totalorder %s14, 0
      %p50 = por %p48, %p49
      %p51 = scmp.ne.s32.totalorder %s40, %s43
      %p52 = scmp.eq.s32.totalorder %s19, 1
      %p53 = por %p51, %p52
      %p54 = scmp.ne.s32.totalorder %s43, %s44
      %p55 = scmp.eq.s32.totalorder %s19, 0
      %p56 = por %p54, %p55
      %p57 = scmp.ne.s32.totalorder %s43, %s44
      %p58 = scmp.eq.s32.totalorder %s20, 1
      %p59 = por %p57, %p58
      %p61 = scmp.ne.s32.totalorder %s44, %s60
      %p62 = scmp.eq.s32.totalorder %s20, 0
      %p63 = por %p61, %p62
      %s64 = smul.u32 %s22, %s21
      %s65 = smul.u32 %s29, %s33
      %s66 = ssub.s32 %s64, %s65
      %p67 = scmp.eq.s32.totalorder %s66, 0
      %s69 = sadd.s32 %s68, 1
      %s70 = scalar_select %p67, %s68, %s69
      %p73 = pneg %p67
      %p74 = scmp.eq.s32.totalorder %s14, 1
      %p75 = por %p73, %p74
      %p76 = scmp.ne.s32.totalorder %s68, %s71
      %p77 = scmp.eq.s32.totalorder %s14, 0
      %p78 = por %p76, %p77
      %p79 = scmp.ne.s32.totalorder %s68, %s71
      %p80 = scmp.eq.s32.totalorder %s19, 1
      %p81 = por %p79, %p80
      %p82 = scmp.ne.s32.totalorder %s71, %s72
      %p83 = scmp.eq.s32.totalorder %s19, 0
      %p84 = por %p82, %p83
      %p85 = scmp.ne.s32.totalorder %s71, %s72
      %p86 = scmp.eq.s32.totalorder %s20, 1
      %p87 = por %p85, %p86
      %p89 = scmp.ne.s32.totalorder %s72, %s88
      %p90 = scmp.eq.s32.totalorder %s20, 0
      %p91 = por %p89, %p90
      %s92 = ssub.s32 %s21, %s33
      %p93 = scmp.eq.s32.totalorder %s92, 0
      %s95 = sadd.s32 %s94, 1
      %s96 = scalar_select %p93, %s94, %s95
      %p99 = pneg %p93
      %p100 = scmp.eq.s32.totalorder %s14, 1
      %p101 = por %p99, %p100
      %p102 = scmp.ne.s32.totalorder %s94, %s97
      %p103 = scmp.eq.s32.totalorder %s14, 0
      %p104 = por %p102, %p103
      %p105 = scmp.ne.s32.totalorder %s94, %s97
      %p106 = scmp.eq.s32.totalorder %s19, 1
      %p107 = por %p105, %p106
      %p108 = scmp.ne.s32.totalorder %s97, %s98
      %p109 = scmp.eq.s32.totalorder %s19, 0
      %p110 = por %p108, %p109
      %p111 = scmp.ne.s32.totalorder %s97, %s98
      %p112 = scmp.eq.s32.totalorder %s20, 1
      %p113 = por %p111, %p112
      %p115 = scmp.ne.s32.totalorder %s98, %s114
      %p116 = scmp.eq.s32.totalorder %s20, 0
      %p117 = por %p115, %p116
      %p118 = scmp.le.s32.totalorder 1, %s14
      %p119 = scmp.lt.s32.totalorder %s14, 3
      %p120 = pnand %p118, %p119
      %p121 = pneg %p120
      // Predicated region
      $region9: #{tpu_custom_call.1} parent=5 // pred_check
        _
      $region10: #{tpu_custom_call.1} parent=5 // pred_check_branch
        %123 = sbr.rel (%p120) target = $region12
      $region11: #{tpu_custom_call.1} parent=5 // pred_region
        %s124 = ssub.s32 %s14, 1
      $region12: #{tpu_custom_call.1} parent=5 // pred_fallthru
        _
      %p125 = scmp.lt.s32.totalorder %s14, 2
      // Predicated region
      $region13: #{tpu_custom_call.1} parent=5 // pred_check
        %p126 = pneg %p125
      $region14: #{tpu_custom_call.1} parent=5 // pred_check_branch
        %128 = sbr.rel (%p126) target = $region16
      $region15: #{tpu_custom_call.1} parent=5 // pred_region
        // Predicated region
        $region17: #{tpu_custom_call.1} parent=15 // pred_check
          %p129 = pneg %p50
        $region18: #{tpu_custom_call.1} parent=15 // pred_check_branch
          %131 = sbr.rel (%p129) target = $region20
        $region19: #{tpu_custom_call.1} parent=15 // pred_region
          %s132 = sand.u32 %s40, 1
          %s133 = scalar_lea.sflag [#allocation3], %s132
          %s134 = sand.u32 %s40, 1
          %s135 = smul.addr %s134, 8
          %s136 = scalar_lea.vmem [#allocation2], %s135
          %s137 = ssub.s32 1, %s21
          %s138 = smul.u32 %s22, %s137
          %140 = vsyncadd %s133, 0
          %s141 = smul.addr %s138, 8
          %s142 = scalar_lea.hbm %s0, %s141
          %s144 = sshll.u32 %s142, 4
          %s145 = int_to_ptr.hbm [resolvable:$true] %s144
          %s146 = sshll.u32 %s136, 4
          %s147 = int_to_ptr.vmem [resolvable:$true] %s146
          %149 = dma.hbm_to_vmem [thread:$0]  %s145, 128, %s147, %s133
        $region20: #{tpu_custom_call.1} parent=15 // pred_fallthru
          _
        // Predicated region
        $region21: #{tpu_custom_call.1} parent=15 // pred_check
          %p150 = pneg %p78
        $region22: #{tpu_custom_call.1} parent=15 // pred_check_branch
          %152 = sbr.rel (%p150) target = $region24
        $region23: #{tpu_custom_call.1} parent=15 // pred_region
          %s153 = sand.u32 %s68, 1
          %s154 = scalar_lea.sflag [#allocation5], %s153
          %s155 = sand.u32 %s68, 1
          %s156 = smul.addr %s155, 8
          %s157 = scalar_lea.vmem [#allocation4], %s156
          %s158 = smul.u32 %s22, %s21
          %160 = vsyncadd %s154, 0
          %s161 = smul.addr %s158, 8
          %s162 = scalar_lea.hbm %s1, %s161
          %s164 = sshll.u32 %s162, 4
          %s165 = int_to_ptr.hbm [resolvable:$true] %s164
          %s166 = sshll.u32 %s157, 4
          %s167 = int_to_ptr.vmem [resolvable:$true] %s166
          %169 = dma.hbm_to_vmem [thread:$0]  %s165, 128, %s167, %s154
        $region24: #{tpu_custom_call.1} parent=15 // pred_fallthru
          _
      $region16: #{tpu_custom_call.1} parent=5 // pred_fallthru
        _
      %p170 = scmp.le.s32.totalorder 1, %s14
      %p171 = scmp.lt.s32.totalorder %s14, 3
      %p172 = pnand %p170, %p171
      %p173 = pneg %p172
      // Predicated region
      $region25: #{tpu_custom_call.1} parent=5 // pred_check
        _
      $region26: #{tpu_custom_call.1} parent=5 // pred_check_branch
        %175 = sbr.rel (%p172) target = $region28
      $region27: #{tpu_custom_call.1} parent=5 // pred_region
        %s176 = ssub.s32 %s14, 1
        %s177 = sand.u32 %s43, 1
        %s178 = scalar_lea.sflag [#allocation3], %s177
        %s179 = sand.u32 %s43, 1
        %s180 = smul.addr %s179, 8
        %s181 = scalar_lea.vmem [#allocation2], %s180
        // Predicated region
        $region29: #{tpu_custom_call.1} parent=27 // pred_check
          %p182 = pneg %p56
        $region30: #{tpu_custom_call.1} parent=27 // pred_check_branch
          %184 = sbr.rel (%p182) target = $region32
        $region31: #{tpu_custom_call.1} parent=27 // pred_region
          %186 = dma.done %s178, 128
        $region32: #{tpu_custom_call.1} parent=27 // pred_fallthru
          _
        %s187 = sand.u32 %s71, 1
        %s188 = scalar_lea.sflag [#allocation5], %s187
        %s189 = sand.u32 %s71, 1
        %s190 = smul.addr %s189, 8
        %s191 = scalar_lea.vmem [#allocation4], %s190
        // Predicated region
        $region33: #{tpu_custom_call.1} parent=27 // pred_check
          %p192 = pneg %p84
        $region34: #{tpu_custom_call.1} parent=27 // pred_check_branch
          %194 = sbr.rel (%p192) target = $region36
        $region35: #{tpu_custom_call.1} parent=27 // pred_region
          %196 = dma.done %s188, 128
        $region36: #{tpu_custom_call.1} parent=27 // pred_fallthru
          _
        %s197 = sand.u32 %s43, 1
        %s198 = scalar_lea.sflag [#allocation3], %s197
        %s199 = sand.u32 %s43, 1
        %s200 = smul.addr %s199, 8
        %s201 = scalar_lea.vmem [#allocation2], %s200
        %p202 = pneg %p56
        %p203 = pneg %p53
        %s204 = sand.u32 %s71, 1
        %s205 = scalar_lea.sflag [#allocation5], %s204
        %s206 = sand.u32 %s71, 1
        %s207 = smul.addr %s206, 8
        %s208 = scalar_lea.vmem [#allocation4], %s207
        %p209 = pneg %p84
        %p210 = pneg %p81
        %p211 = pneg %p110
        %p212 = pneg %p107
        %p213 = scmp.lt.s32.totalorder %s23, 1
        %s214 = scalar_select %p213, %s23, 1
        %s215 = smul.addr %s214, 4
        %s216 = scalar_lea.vmem %s2, %s215
        %s217 = ssub.s32 1, %s23
        %s218 = smul.u32 %s24, %s217
        %s219 = smul.u32 %s24, %s23
        %p220 = scmp.lt.s32.totalorder %s23, 1
        %s221 = scalar_select %p220, %s23, 1
        %s222 = smul.addr %s221, 4
        %s223 = scalar_lea.vmem %s2, %s222
        %p224 = scmp.eq.s32.totalorder %s24, 0
        // Predicated region
        $region37: #{tpu_custom_call.1} parent=27 // pred_check
          %p225 = pneg %p224
        $region38: #{tpu_custom_call.1} parent=27 // pred_check_branch
          %227 = sbr.rel (%p225) target = $region40
        $region39: #{tpu_custom_call.1} parent=27 // pred_region
          %228 = vst [vmem:[%s223] sm:$0x7] 0.0
        $region40: #{tpu_custom_call.1} parent=27 // pred_fallthru
          _
        %p229 = scmp.eq.s32.totalorder %s23, 0
        // Predicated region
        $region41: #{tpu_custom_call.1} parent=27 // pred_check
          %p230 = pneg %p229
        $region42: #{tpu_custom_call.1} parent=27 // pred_check_branch
          %232 = sbr.rel (%p230) target = $region44
        $region43: #{tpu_custom_call.1} parent=27 // pred_region
          %v233 = vld [vmem:[%s181] sm:$0xff]
          %v234 = vrot.slane %v233, 4
          %v235 = vadd.f32 %v233, %v234
          %v236 = vrot.slane %v235, 2
          %v237 = vadd.f32 %v235, %v236
          %v238 = vrot.slane %v237, 1
          %v239 = vadd.f32 %v237, %v238
          %v240 = vmul.f32 %v233, %v233
          %v241 = vrot.slane %v240, 4
          %v242 = vadd.f32 %v240, %v241
          %v243 = vrot.slane %v242, 2
          %v244 = vadd.f32 %v242, %v243
          %v245 = vrot.slane %v244, 1
          %v246 = vadd.f32 %v244, %v245
          %v247 = vmul.f32 %v240, %v233
          %v248 = vrot.slane %v247, 4
          %v249 = vadd.f32 %v247, %v248
          %v250 = vrot.slane %v249, 2
          %v251 = vadd.f32 %v249, %v250
          %v252 = vrot.slane %v251, 1
          %v253 = vadd.f32 %v251, %v252
          %v254 = vld [vmem:[%s223] sm:$0x7]
          %vm255 = vcmask 1040384
          %v256 = vsel %vm255, %v239, %v246
          %vm257 = vcmask 1041408
          %v258 = vsel %vm257, %v256, %v253
          %v259 = vadd.f32 %v254, %v258
          %260 = vst [vmem:[%s223] sm:$0x7] %v259
        $region44: #{tpu_custom_call.1} parent=27 // pred_fallthru
          _
        %p261 = scmp.eq.s32.totalorder %s23, 1
        // Predicated region
        $region45: #{tpu_custom_call.1} parent=27 // pred_check
          %p262 = pneg %p261
        $region46: #{tpu_custom_call.1} parent=27 // pred_check_branch
          %264 = sbr.rel (%p262) target = $region48
        $region47: #{tpu_custom_call.1} parent=27 // pred_region
          %v265 = vld [vmem:[%s191] sm:$0xff]
          %v266 = vrot.slane %v265, 4
          %v267 = vadd.f32 %v265, %v266
          %v268 = vrot.slane %v267, 2
          %v269 = vadd.f32 %v267, %v268
          %v270 = vrot.slane %v269, 1
          %v271 = vadd.f32 %v269, %v270
          %v272 = vmul.f32 %v265, %v265
          %v273 = vrot.slane %v272, 4
          %v274 = vadd.f32 %v272, %v273
          %v275 = vrot.slane %v274, 2
          %v276 = vadd.f32 %v274, %v275
          %v277 = vrot.slane %v276, 1
          %v278 = vadd.f32 %v276, %v277
          %v279 = vmul.f32 %v272, %v265
          %v280 = vrot.slane %v279, 4
          %v281 = vadd.f32 %v279, %v280
          %v282 = vrot.slane %v281, 2
          %v283 = vadd.f32 %v281, %v282
          %v284 = vrot.slane %v283, 1
          %v285 = vadd.f32 %v283, %v284
          %v286 = vld [vmem:[%s223] sm:$0x7]
          %vm287 = vcmask 1040384
          %v288 = vsel %vm287, %v271, %v278
          %vm289 = vcmask 1041408
          %v290 = vsel %vm289, %v288, %v285
          %v291 = vadd.f32 %v286, %v290
          %292 = vst [vmem:[%s223] sm:$0x7] %v291
        $region48: #{tpu_custom_call.1} parent=27 // pred_fallthru
          _
        %p293 = scmp.lt.s32.totalorder %s23, 1
        %s294 = scalar_select %p293, %s23, 1
        %s295 = smul.addr %s294, 4
        %s296 = scalar_lea.vmem %s2, %s295
        // Predicated region
        $region49: #{tpu_custom_call.1} parent=27 // pred_check
          %p297 = pneg %p107
        $region50: #{tpu_custom_call.1} parent=27 // pred_check_branch
          %299 = sbr.rel (%p297) target = $region52
        $region51: #{tpu_custom_call.1} parent=27 // pred_region
          _
        $region52: #{tpu_custom_call.1} parent=27 // pred_fallthru
          _
      $region28: #{tpu_custom_call.1} parent=5 // pred_fallthru
        _
      %p300 = scmp.le.s32.totalorder 2, %s14
      // Predicated region
      $region53: #{tpu_custom_call.1} parent=5 // pred_check
        %p301 = pneg %p300
      $region54: #{tpu_custom_call.1} parent=5 // pred_check_branch
        %303 = sbr.rel (%p301) target = $region56
      $region55: #{tpu_custom_call.1} parent=5 // pred_region
        %s304 = ssub.s32 %s14, 2
        // Predicated region
        $region57: #{tpu_custom_call.1} parent=55 // pred_check
          %p305 = pneg %p113
        $region58: #{tpu_custom_call.1} parent=55 // pred_check_branch
          %307 = sbr.rel (%p305) target = $region60
        $region59: #{tpu_custom_call.1} parent=55 // pred_region
          %p308 = scmp.lt.s32.totalorder %s25, 1
          %s309 = scalar_select %p308, %s25, 1
          %s310 = smul.addr %s309, 4
          %s311 = scalar_lea.vmem %s2, %s310
        $region60: #{tpu_custom_call.1} parent=55 // pred_fallthru
          _
      $region56: #{tpu_custom_call.1} parent=5 // pred_fallthru
        _
    $region6: #{tpu_custom_call.1} parent=1 // loop_footer
      %s18 = sadd.s32 1, %s14
    $region7: #{tpu_custom_call.1} parent=1 // loop_footer_branch
      %13 = sbr.rel target = $region3
    $region8: #{tpu_custom_call.1} parent=1 // loop_exit
      _
    %312 = vsyncpa [#allocation3], 1
    %s313 = scalar_lea.sflag [#allocation3], 1
    %314 = vsyncpa %s313, 1
    %315 = vsyncpa [#allocation5], 1
    %s316 = scalar_lea.sflag [#allocation5], 1
    %317 = vsyncpa %s316, 1

</llo_original>
